<compile_context>
chip_gen: v7x
topology: tpu7x:2x2x1
jax: 0.10.0
libtpu: 0.0.40
codegen_flags: <defaults>
</compile_context>

<pallas_src>
import jax
import jax.numpy as jnp
from jax.experimental import pallas as pl
from jax.experimental.pallas import tpu as pltpu


def _round_up(n, m):
    return ((n + m - 1) // m) * m


def actor_kernel(x_ref, w1_ref, b1_ref, w2_ref, b2_ref, w3_ref, b3_ref, o_ref):
    # fc1 + ReLU  (bf16 MXU operands, f32 accumulation)
    x = x_ref[...].astype(jnp.bfloat16)
    h1 = jnp.dot(x, w1_ref[...], preferred_element_type=jnp.float32)
    h1 = jnp.maximum(h1 + b1_ref[...], 0.0)
    # fc2 + ReLU
    h2 = jnp.dot(h1.astype(jnp.bfloat16), w2_ref[...],
                 preferred_element_type=jnp.float32)
    h2 = jnp.maximum(h2 + b2_ref[...], 0.0)
    # fc3 + Sigmoid (exp runs on the EUP slot, hidden under the DMA stream)
    z3 = jnp.dot(h2.astype(jnp.bfloat16), w3_ref[...],
                 preferred_element_type=jnp.float32)
    o_ref[...] = jax.nn.sigmoid(z3 + b3_ref[...])


def _choose_tile(B, *, max_tb=2048, target_grid=4):
    """Pick a batch tile so padding waste is small and the grid is megacore-friendly."""
    b8 = _round_up(max(B, 1), 8)
    if b8 <= max_tb:
        if b8 >= target_grid * 256:
            # big enough to split evenly across 2 TCs with >=2 steps each
            tb = _round_up(pl.cdiv(b8, target_grid), 8)
        else:
            # tiny batch: single block, launch overhead dominates anyway
            tb = b8
    else:
        n = max(target_grid, pl.cdiv(b8, max_tb))
        if n % 2:
            n += 1  # even grid -> balanced across the two v7x TensorCores
        tb = min(max_tb, _round_up(pl.cdiv(b8, n), 8))
    grid = pl.cdiv(b8, tb)
    bp = grid * tb
    return tb, bp, grid


def actor_forward(x, params):
    """x: (B, num_inputs) float32. params: dict of (in,out) weights + (1,out) biases."""
    w1, b1 = params["w1"], params["b1"]
    w2, b2 = params["w2"], params["b2"]
    w3, b3 = params["w3"], params["b3"]

    B, f_in = x.shape
    h1_dim, h2_dim, f_out = w1.shape[1], w2.shape[1], w3.shape[1]

    # bf16 weights: MXU-native operands, halves the (tiny) weight DMA.
    w1b, w2b, w3b = (w.astype(jnp.bfloat16) for w in (w1, w2, w3))

    # ---- adaptive batch tiling ----
    tb, bp, grid_len = _choose_tile(B)
    xp = x if bp == B else jnp.pad(x, ((0, bp - B), (0, 0)))

    const = lambda shape: pl.BlockSpec(shape, lambda i: (0, 0))  # VMEM-resident

    # Advisory cost estimate so XLA can overlap this call with neighbors.
    cost = pl.CostEstimate(
        flops=2 * bp * (f_in * h1_dim + h1_dim * h2_dim + h2_dim * f_out),
        transcendentals=bp * f_out,
        bytes_accessed=(xp.size * 4 + bp * f_out * 4
                        + (w1b.size + w2b.size + w3b.size) * 2
                        + (b1.size + b2.size + b3.size) * 4),
    )

    out = pl.pallas_call(
        actor_kernel,
        out_shape=jax.ShapeDtypeStruct((bp, f_out), jnp.float32),
        grid=(grid_len,),
        in_specs=[
            pl.BlockSpec((tb, f_in), lambda i: (i, 0)),   # x: streamed over batch
            const(w1b.shape), const(b1.shape),
            const(w2b.shape), const(b2.shape),
            const(w3b.shape), const(b3.shape),
        ],
        # f_out equals the full array dim -> legal block, no 128-lane padding,
        # 4x smaller output HBM stream and no wrapper column slice.
        out_specs=pl.BlockSpec((tb, f_out), lambda i: (i, 0)),
        compiler_params=pltpu.CompilerParams(
            dimension_semantics=("parallel",),            # megacore on v7x
            vmem_limit_bytes=32 << 20),                   # headroom for tb sweeps on v5e
        cost_estimate=cost,
    )(xp, w1b, b1, w2b, b2, w3b, b3)

    return out if bp == B else out[:B]


def init_params(key, num_inputs):
    """Deterministic init mimicking PyTorch nn.Linear default (uniform +-1/sqrt(fan_in))."""
    def linear(key, fan_in, fan_out):
        kw, kb = jax.random.split(key)
        bound = 1.0 / jnp.sqrt(jnp.float32(fan_in))
        # stored as (in, out) so the kernel computes x @ W
        w = jax.random.uniform(kw, (fan_in, fan_out), jnp.float32, -bound, bound)
        b = jax.random.uniform(kb, (1, fan_out), jnp.float32, -bound, bound)
        return w, b

    k1, k2, k3 = jax.random.split(key, 3)
    w1, b1 = linear(k1, num_inputs, 64)
    w2, b2 = linear(k2, 64, 32)
    w3, b3 = linear(k3, 32, num_inputs)
    return dict(w1=w1, b1=b1, w2=w2, b2=b2, w3=w3, b3=b3)


def actor_reference(x, p):
    h1 = jnp.maximum(x @ p["w1"] + p["b1"], 0.0)
    h2 = jnp.maximum(h1 @ p["w2"] + p["b2"], 0.0)
    return jax.nn.sigmoid(h2 @ p["w3"] + p["b3"])


if __name__ == "__main__":
    key = jax.random.PRNGKey(0)
    kx, kp = jax.random.split(key)

    batch = 8
    num_inputs = 32

    x = jax.random.normal(kx, (batch, num_inputs), jnp.float32)
    params = init_params(kp, num_inputs)

    out = jax.block_until_ready(actor_forward(x, params))
    ref = actor_reference(x, params)
    assert out.shape == (batch, num_inputs)
    # bf16 MXU operands -> loosened tolerance vs. the f32 reference
    assert jnp.allclose(out, ref, atol=2e-2, rtol=2e-2), "mismatch vs reference"

    # also exercise the batch-tiled / megacore path with a non-aligned larger batch
    xb = jax.random.normal(kx, (3000, num_inputs), jnp.float32)
    outb = jax.block_until_ready(actor_forward(xb, params))
    refb = actor_reference(xb, params)
    assert outb.shape == (3000, num_inputs)
    assert jnp.allclose(outb, refb, atol=2e-2, rtol=2e-2), "mismatch vs reference (large B)"

    print("KERNEL_OK")
</pallas_src>

<mosaic_0001>
module attributes {stable_mosaic.version = 11 : i64} {
  func.func @actor_kernel(%arg0: i32, %arg1: memref<8x32xf32, #tpu.memory_space<vmem>>, %arg2: memref<32x64xbf16, #tpu.memory_space<vmem>>, %arg3: memref<1x64xf32, #tpu.memory_space<vmem>>, %arg4: memref<64x32xbf16, #tpu.memory_space<vmem>>, %arg5: memref<1x32xf32, #tpu.memory_space<vmem>>, %arg6: memref<32x32xbf16, #tpu.memory_space<vmem>>, %arg7: memref<1x32xf32, #tpu.memory_space<vmem>>, %arg8: memref<8x32xf32, #tpu.memory_space<vmem>>) attributes {dimension_semantics = [#tpu.dimension_semantics<parallel>], iteration_bounds = array<i64: 1>, scalar_prefetch = 0 : i64, scratch_operands = 0 : i64, tpu.core_type = #tpu.core_type<tc>, window_params = [{transform_indices = @transform_0, window_bounds = array<i64: 8, 32>}, {pipeline_mode = #tpu.pipeline_mode<synchronous>, transform_indices = @transform_1, window_bounds = array<i64: 32, 64>}, {pipeline_mode = #tpu.pipeline_mode<synchronous>, transform_indices = @transform_2, window_bounds = array<i64: 1, 64>}, {pipeline_mode = #tpu.pipeline_mode<synchronous>, transform_indices = @transform_3, window_bounds = array<i64: 64, 32>}, {pipeline_mode = #tpu.pipeline_mode<synchronous>, transform_indices = @transform_4, window_bounds = array<i64: 1, 32>}, {pipeline_mode = #tpu.pipeline_mode<synchronous>, transform_indices = @transform_5, window_bounds = array<i64: 32, 32>}, {pipeline_mode = #tpu.pipeline_mode<synchronous>, transform_indices = @transform_6, window_bounds = array<i64: 1, 32>}, {transform_indices = @transform_7, window_bounds = array<i64: 8, 32>}]} {
    %c0 = arith.constant 0 : index
    %c0_0 = arith.constant 0 : index
    %0 = vector.load %arg1[%c0, %c0_0] : memref<8x32xf32, #tpu.memory_space<vmem>>, vector<8x32xf32>
    %1 = arith.truncf %0 : vector<8x32xf32> to vector<8x32xbf16>
    %c0_1 = arith.constant 0 : index
    %c0_2 = arith.constant 0 : index
    %2 = vector.load %arg2[%c0_1, %c0_2] : memref<32x64xbf16, #tpu.memory_space<vmem>>, vector<32x64xbf16>
    %cst = arith.constant dense<0.000000e+00> : vector<8x64xf32>
    %3 = tpu.matmul %1, %2, %cst {dimension_numbers = #tpu.dot_dimension_numbers<[1], [0], [0], [1], [0, 0, 1, 1], [], []>} : vector<8x32xbf16>, vector<32x64xbf16>, vector<8x64xf32> -> vector<8x64xf32>
    %c0_3 = arith.constant 0 : index
    %c0_4 = arith.constant 0 : index
    %4 = vector.load %arg3[%c0_3, %c0_4] : memref<1x64xf32, #tpu.memory_space<vmem>>, vector<1x64xf32>
    %5 = vector.broadcast %4 : vector<1x64xf32> to vector<8x64xf32>
    %6 = arith.addf %3, %5 : vector<8x64xf32>
    %cst_5 = arith.constant 0.000000e+00 : f32
    %7 = vector.broadcast %cst_5 : f32 to vector<8x64xf32>
    %8 = arith.maximumf %6, %7 : vector<8x64xf32>
    %9 = arith.truncf %8 : vector<8x64xf32> to vector<8x64xbf16>
    %c0_6 = arith.constant 0 : index
    %c0_7 = arith.constant 0 : index
    %10 = vector.load %arg4[%c0_6, %c0_7] : memref<64x32xbf16, #tpu.memory_space<vmem>>, vector<64x32xbf16>
    %cst_8 = arith.constant dense<0.000000e+00> : vector<8x32xf32>
    %11 = tpu.matmul %9, %10, %cst_8 {dimension_numbers = #tpu.dot_dimension_numbers<[1], [0], [0], [1], [0, 0, 1, 1], [], []>} : vector<8x64xbf16>, vector<64x32xbf16>, vector<8x32xf32> -> vector<8x32xf32>
    %c0_9 = arith.constant 0 : index
    %c0_10 = arith.constant 0 : index
    %12 = vector.load %arg5[%c0_9, %c0_10] : memref<1x32xf32, #tpu.memory_space<vmem>>, vector<1x32xf32>
    %13 = vector.broadcast %12 : vector<1x32xf32> to vector<8x32xf32>
    %14 = arith.addf %11, %13 : vector<8x32xf32>
    %cst_11 = arith.constant 0.000000e+00 : f32
    %15 = vector.broadcast %cst_11 : f32 to vector<8x32xf32>
    %16 = arith.maximumf %14, %15 : vector<8x32xf32>
    %17 = arith.truncf %16 : vector<8x32xf32> to vector<8x32xbf16>
    %c0_12 = arith.constant 0 : index
    %c0_13 = arith.constant 0 : index
    %18 = vector.load %arg6[%c0_12, %c0_13] : memref<32x32xbf16, #tpu.memory_space<vmem>>, vector<32x32xbf16>
    %cst_14 = arith.constant dense<0.000000e+00> : vector<8x32xf32>
    %19 = tpu.matmul %17, %18, %cst_14 {dimension_numbers = #tpu.dot_dimension_numbers<[1], [0], [0], [1], [0, 0, 1, 1], [], []>} : vector<8x32xbf16>, vector<32x32xbf16>, vector<8x32xf32> -> vector<8x32xf32>
    %c0_15 = arith.constant 0 : index
    %c0_16 = arith.constant 0 : index
    %20 = vector.load %arg7[%c0_15, %c0_16] : memref<1x32xf32, #tpu.memory_space<vmem>>, vector<1x32xf32>
    %21 = vector.broadcast %20 : vector<1x32xf32> to vector<8x32xf32>
    %22 = arith.addf %19, %21 : vector<8x32xf32>
    %23 = arith.negf %22 : vector<8x32xf32>
    %24 = math.exp %23 : vector<8x32xf32>
    %cst_17 = arith.constant 1.000000e+00 : f32
    %25 = vector.broadcast %cst_17 : f32 to vector<8x32xf32>
    %26 = arith.addf %25, %24 : vector<8x32xf32>
    %27 = arith.divf %25, %26 : vector<8x32xf32>
    %c0_18 = arith.constant 0 : index
    %c0_19 = arith.constant 0 : index
    %28 = vector.load %arg8[%c0_18, %c0_19] : memref<8x32xf32, #tpu.memory_space<vmem>>, vector<8x32xf32>
    tpu.vector_store %arg8[%c0_18, %c0_19], %27 {strides = array<i32>} : memref<8x32xf32, #tpu.memory_space<vmem>>, vector<8x32xf32>,
    return
  }
  func.func @transform_0(%arg0: i32) -> (i32, i32) {
    %c0_i32 = arith.constant 0 : i32
    %c0_i32_0 = arith.constant 0 : i32
    return %arg0, %c0_i32 : i32, i32
  }
  func.func @transform_1(%arg0: i32) -> (i32, i32) {
    %c0_i32 = arith.constant 0 : i32
    %c0_i32_0 = arith.constant 0 : i32
    %c0_i32_1 = arith.constant 0 : i32
    return %c0_i32, %c0_i32_0 : i32, i32
  }
  func.func @transform_2(%arg0: i32) -> (i32, i32) {
    %c0_i32 = arith.constant 0 : i32
    %c0_i32_0 = arith.constant 0 : i32
    %c0_i32_1 = arith.constant 0 : i32
    return %c0_i32, %c0_i32_0 : i32, i32
  }
  func.func @transform_3(%arg0: i32) -> (i32, i32) {
    %c0_i32 = arith.constant 0 : i32
    %c0_i32_0 = arith.constant 0 : i32
    %c0_i32_1 = arith.constant 0 : i32
    return %c0_i32, %c0_i32_0 : i32, i32
  }
  func.func @transform_4(%arg0: i32) -> (i32, i32) {
    %c0_i32 = arith.constant 0 : i32
    %c0_i32_0 = arith.constant 0 : i32
    %c0_i32_1 = arith.constant 0 : i32
    return %c0_i32, %c0_i32_0 : i32, i32
  }
  func.func @transform_5(%arg0: i32) -> (i32, i32) {
    %c0_i32 = arith.constant 0 : i32
    %c0_i32_0 = arith.constant 0 : i32
    %c0_i32_1 = arith.constant 0 : i32
    return %c0_i32, %c0_i32_0 : i32, i32
  }
  func.func @transform_6(%arg0: i32) -> (i32, i32) {
    %c0_i32 = arith.constant 0 : i32
    %c0_i32_0 = arith.constant 0 : i32
    %c0_i32_1 = arith.constant 0 : i32
    return %c0_i32, %c0_i32_0 : i32, i32
  }
  func.func @transform_7(%arg0: i32) -> (i32, i32) {
    %c0_i32 = arith.constant 0 : i32
    %c0_i32_0 = arith.constant 0 : i32
    return %arg0, %c0_i32 : i32, i32
  }
}

</mosaic_0001>

<llo_original>
// kernel: tpu_custom_call.1
$region0: #{tpu_custom_call.1}
  #allocation0 [shape = 'u32[]', space=smem, size = 0x4, offset = 0x4, fixed_abs, tag = 'smem constant byte address 0x4 - core index']
  #allocation1 [shape = 'u32[144,128]{1,0:T(1,128)}', space=vmem, size = 0x12000, scoped, tag = 'internal scratch']
  %s0 = inlined_call_operand.vmem [shape: f32[8,32], index: 0, kind: input, shape index: {}]
  %s1 = inlined_call_operand.vmem [shape: bf16[32,64], index: 1, kind: input, shape index: {}]
  %s2 = inlined_call_operand.vmem [shape: f32[1,64], index: 2, kind: input, shape index: {}]
  %s3 = inlined_call_operand.vmem [shape: bf16[64,32], index: 3, kind: input, shape index: {}]
  %s4 = inlined_call_operand.vmem [shape: f32[1,32], index: 4, kind: input, shape index: {}]
  %s5 = inlined_call_operand.vmem [shape: bf16[32,32], index: 5, kind: input, shape index: {}]
  %s6 = inlined_call_operand.vmem [shape: f32[1,32], index: 6, kind: input, shape index: {}]
  %s7 = inlined_call_operand.hbm [shape: f32[8,32], index: 7, kind: output, shape index: {}]
  %s8 = sld [smem:[#allocation0]]
  $region38: #{tpu_custom_call.1} parent=0
    _
  %s10 = ssub.s32 1, %s8
  %s11 = scalar_select 0, %s10, %s8
  $region1: #{tpu_custom_call.1} parent=0
    #allocation2 [shape = 'u8[4096]{0}', space=vmem, size = 0x1000, scoped, tag = 'output window, operand 0, single buffered']
    #allocation3 [shape = 's32[1]{0}', space=sflag, size = 0x4, scoped, tag = 'scoped memory for tpu_custom_call.1']
    %12 = vsyncpa [#allocation3], 0
    // Predicated region
    $region2: #{tpu_custom_call.1} parent=1 // pred_check
      _
    $region3: #{tpu_custom_call.1} parent=1 // pred_check_branch
      %14 = sbr.rel (0) target = $region5
    $region4: #{tpu_custom_call.1} parent=1 // pred_region
      _
    $region5: #{tpu_custom_call.1} parent=1 // pred_fallthru
      _
    // Predicated region
    $region6: #{tpu_custom_call.1} parent=1 // pred_check
      _
    $region7: #{tpu_custom_call.1} parent=1 // pred_check_branch
      %16 = sbr.rel (0) target = $region9
    $region8: #{tpu_custom_call.1} parent=1 // pred_region
      _
    $region9: #{tpu_custom_call.1} parent=1 // pred_fallthru
      _
    // Predicated region
    $region10: #{tpu_custom_call.1} parent=1 // pred_check
      _
    $region11: #{tpu_custom_call.1} parent=1 // pred_check_branch
      %18 = sbr.rel (0) target = $region13
    $region12: #{tpu_custom_call.1} parent=1 // pred_region
      _
    $region13: #{tpu_custom_call.1} parent=1 // pred_fallthru
      _
    // Predicated region
    $region14: #{tpu_custom_call.1} parent=1 // pred_check
      _
    $region15: #{tpu_custom_call.1} parent=1 // pred_check_branch
      %20 = sbr.rel (0) target = $region17
    $region16: #{tpu_custom_call.1} parent=1 // pred_region
      _
    $region17: #{tpu_custom_call.1} parent=1 // pred_fallthru
      _
    // Predicated region
    $region18: #{tpu_custom_call.1} parent=1 // pred_check
      _
    $region19: #{tpu_custom_call.1} parent=1 // pred_check_branch
      %22 = sbr.rel (0) target = $region21
    $region20: #{tpu_custom_call.1} parent=1 // pred_region
      _
    $region21: #{tpu_custom_call.1} parent=1 // pred_fallthru
      _
    // Predicated region
    $region22: #{tpu_custom_call.1} parent=1 // pred_check
      _
    $region23: #{tpu_custom_call.1} parent=1 // pred_check_branch
      %24 = sbr.rel (0) target = $region25
    $region24: #{tpu_custom_call.1} parent=1 // pred_region
      _
    $region25: #{tpu_custom_call.1} parent=1 // pred_fallthru
      _
    // Predicated region
    $region26: #{tpu_custom_call.1} parent=1 // pred_check
      _
    $region27: #{tpu_custom_call.1} parent=1 // pred_check_branch
      %26 = sbr.rel (0) target = $region29
    $region28: #{tpu_custom_call.1} parent=1 // pred_region
      _
    $region29: #{tpu_custom_call.1} parent=1 // pred_fallthru
      _
    %v28 = vld [vmem:[%s0] sm:$0xff]
    %v29 = vpack.c.bf16 %v28, %v28
    %v30 = vld [vmem:[%s1] sm:$0xf]
    %v31 = vld [vmem:[%s1 + $0x4] sm:$0xf]
    %v32 = vld [vmem:[%s1 + $0x8] sm:$0xf]
    %v33 = vld [vmem:[%s1 + $0xc] sm:$0xf]
    %v34 = vld [vmem:[%s2] sm:$0x1]
    %v36 = vlaneseq
    %v37 = vshrl.u32 %v36, 7
    %v38 = vsub.s32 0, %v37
    %v39 = vrot.slane %v34, %v38
    %v45 = vunpack.c.l.b16 %v30
    %v46 = vunpack.c.l.b16 %v31
    %v47 = vunpack.c.l.b16 %v32
    %v48 = vunpack.c.l.b16 %v33
    %v49 = vpack.c.b16 %v46, %v45
    %v50 = vpack.c.b16 %v48, %v47
    %vm53 = vcmask 261120
    %v55 = vsel %vm53, %v29, 0
    %57 = vmatprep.subr.bf16.mxu0 0
    %58 = vmatpush1.bf16.msra.mxu0 %v49
    %59 = vmatprep.subr.bf16.mxu0 0
    %60 = vmatpush1.bf16.msra.mxu0 %v50
    %61 = vmatprep.subr.bf16.mxu0 0
    %62 = vmatpush1.bf16.msra.mxu0 0
    %63 = vmatprep.subr.bf16.mxu0 0
    %64 = vmatpush1.bf16.msra.mxu0 0
    %65 = vmatprep.subr.bf16.mxu0 0
    %66 = vmatpush1.bf16.msra.mxu0 0
    %67 = vmatprep.subr.bf16.mxu0 0
    %68 = vmatpush1.bf16.msra.mxu0 0
    %69 = vmatprep.subr.bf16.mxu0 0
    %70 = vmatpush1.bf16.msra.mxu0 0
    %71 = vmatprep.subr.bf16.mxu0 0
    %72 = vmatpush1.bf16.msra.mxu0 0
    %73 = vmatprep.subr.bf16.mxu0 0
    %74 = vmatpush1.bf16.msra.mxu0 0
    %75 = vmatprep.subr.bf16.mxu0 0
    %76 = vmatpush1.bf16.msra.mxu0 0
    %77 = vmatprep.subr.bf16.mxu0 0
    %78 = vmatpush1.bf16.msra.mxu0 0
    %79 = vmatprep.subr.bf16.mxu0 0
    %80 = vmatpush1.bf16.msra.mxu0 0
    %81 = vmatprep.subr.bf16.mxu0 0
    %82 = vmatpush1.bf16.msra.mxu0 0
    %83 = vmatprep.subr.bf16.mxu0 0
    %84 = vmatpush1.bf16.msra.mxu0 0
    %85 = vmatprep.subr.bf16.mxu0 0
    %86 = vmatpush1.bf16.msra.mxu0 0
    %87 = vmatprep.subr.bf16.mxu0 0
    %88 = vmatpush1.bf16.msra.mxu0 0
    %89 = vmatprep.mubr.bf16.mxu0 0
    %90 = vmatmul.mubr.bf16.gmra.mrb[0].mxu0 %v55
    %v91 = vpop.f32.mrb[0].mxu0
    %v92 = vadd.f32 %v39, %v91
    %v93 = vpop.f32.mrb[0].mxu0
    %v94 = vpop.f32.mrb[0].mxu0
    %v95 = vpop.f32.mrb[0].mxu0
    %96 = vdwg.mxu0
    %v97 = vmax.f32 %v92, 0.0
    %v98 = vpack.c.bf16 %v97, %v97
    %v99 = vld [vmem:[%s3] sm:$0xf]
    %v100 = vld [vmem:[%s3 + $0x4] sm:$0xf]
    %v101 = vld [vmem:[%s3 + $0x8] sm:$0xf]
    %v102 = vld [vmem:[%s3 + $0xc] sm:$0xf]
    %v103 = vld [vmem:[%s3 + $0x10] sm:$0xf]
    %v104 = vld [vmem:[%s3 + $0x14] sm:$0xf]
    %v105 = vld [vmem:[%s3 + $0x18] sm:$0xf]
    %v106 = vld [vmem:[%s3 + $0x1c] sm:$0xf]
    %v107 = vld [vmem:[%s4] sm:$0x1]
    %v109 = vlaneseq
    %v110 = vshrl.u32 %v109, 7
    %v111 = vsub.s32 0, %v110
    %v112 = vrot.slane %v107, %v111
    %v122 = vunpack.c.l.b16 %v99
    %v123 = vunpack.c.l.b16 %v100
    %v124 = vunpack.c.l.b16 %v101
    %v125 = vunpack.c.l.b16 %v102
    %v126 = vunpack.c.l.b16 %v103
    %v127 = vunpack.c.l.b16 %v104
    %v128 = vunpack.c.l.b16 %v105
    %v129 = vunpack.c.l.b16 %v106
    %v130 = vpack.c.b16 %v123, %v122
    %v131 = vpack.c.b16 %v125, %v124
    %v132 = vpack.c.b16 %v127, %v126
    %v133 = vpack.c.b16 %v129, %v128
    %vm138 = vcmask 523264
    %v140 = vsel %vm138, %v98, 0
    %142 = vmatprep.subr.bf16.mxu0 0
    %143 = vmatpush1.bf16.msra.mxu0 %v130
    %144 = vmatprep.subr.bf16.mxu0 0
    %145 = vmatpush1.bf16.msra.mxu0 %v131
    %146 = vmatprep.subr.bf16.mxu0 0
    %147 = vmatpush1.bf16.msra.mxu0 %v132
    %148 = vmatprep.subr.bf16.mxu0 0
    %149 = vmatpush1.bf16.msra.mxu0 %v133
    %150 = vmatprep.subr.bf16.mxu0 0
    %151 = vmatpush1.bf16.msra.mxu0 0
    %152 = vmatprep.subr.bf16.mxu0 0
    %153 = vmatpush1.bf16.msra.mxu0 0
    %154 = vmatprep.subr.bf16.mxu0 0
    %155 = vmatpush1.bf16.msra.mxu0 0
    %156 = vmatprep.subr.bf16.mxu0 0
    %157 = vmatpush1.bf16.msra.mxu0 0
    %158 = vmatprep.subr.bf16.mxu0 0
    %159 = vmatpush1.bf16.msra.mxu0 0
    %160 = vmatprep.subr.bf16.mxu0 0
    %161 = vmatpush1.bf16.msra.mxu0 0
    %162 = vmatprep.subr.bf16.mxu0 0
    %163 = vmatpush1.bf16.msra.mxu0 0
    %164 = vmatprep.subr.bf16.mxu0 0
    %165 = vmatpush1.bf16.msra.mxu0 0
    %166 = vmatprep.subr.bf16.mxu0 0
    %167 = vmatpush1.bf16.msra.mxu0 0
    %168 = vmatprep.subr.bf16.mxu0 0
    %169 = vmatpush1.bf16.msra.mxu0 0
    %170 = vmatprep.subr.bf16.mxu0 0
    %171 = vmatpush1.bf16.msra.mxu0 0
    %172 = vmatprep.subr.bf16.mxu0 0
    %173 = vmatpush1.bf16.msra.mxu0 0
    %174 = vmatprep.mubr.bf16.mxu0 0
    %175 = vmatmul.mubr.bf16.gmra.mrb[0].mxu0 %v140
    %v176 = vpop.f32.mrb[0].mxu0
    %v177 = vadd.f32 %v112, %v176
    %v178 = vpop.f32.mrb[0].mxu0
    %v179 = vpop.f32.mrb[0].mxu0
    %v180 = vpop.f32.mrb[0].mxu0
    %181 = vdwg.mxu0
    %v182 = vmax.f32 %v177, 0.0
    %v183 = vpack.c.bf16 %v182, %v182
    %v184 = vld [vmem:[%s5] sm:$0xf]
    %v185 = vld [vmem:[%s5 + $0x4] sm:$0xf]
    %v186 = vld [vmem:[%s5 + $0x8] sm:$0xf]
    %v187 = vld [vmem:[%s5 + $0xc] sm:$0xf]
    %v188 = vld [vmem:[%s6] sm:$0x1]
    %v190 = vlaneseq
    %v191 = vshrl.u32 %v190, 7
    %v192 = vsub.s32 0, %v191
    %v193 = vrot.slane %v188, %v192
    %v199 = vunpack.c.l.b16 %v184
    %v200 = vunpack.c.l.b16 %v185
    %v201 = vunpack.c.l.b16 %v186
    %v202 = vunpack.c.l.b16 %v187
    %v203 = vpack.c.b16 %v200, %v199
    %v204 = vpack.c.b16 %v202, %v201
    %v208 = vsel %vm53, %v183, 0
    %210 = vmatprep.subr.bf16.mxu0 0
    %211 = vmatpush1.bf16.msra.mxu0 %v203
    %212 = vmatprep.subr.bf16.mxu0 0
    %213 = vmatpush1.bf16.msra.mxu0 %v204
    %214 = vmatprep.subr.bf16.mxu0 0
    %215 = vmatpush1.bf16.msra.mxu0 0
    %216 = vmatprep.subr.bf16.mxu0 0
    %217 = vmatpush1.bf16.msra.mxu0 0
    %218 = vmatprep.subr.bf16.mxu0 0
    %219 = vmatpush1.bf16.msra.mxu0 0
    %220 = vmatprep.subr.bf16.mxu0 0
    %221 = vmatpush1.bf16.msra.mxu0 0
    %222 = vmatprep.subr.bf16.mxu0 0
    %223 = vmatpush1.bf16.msra.mxu0 0
    %224 = vmatprep.subr.bf16.mxu0 0
    %225 = vmatpush1.bf16.msra.mxu0 0
    %226 = vmatprep.subr.bf16.mxu0 0
    %227 = vmatpush1.bf16.msra.mxu0 0
    %228 = vmatprep.subr.bf16.mxu0 0
    %229 = vmatpush1.bf16.msra.mxu0 0
    %230 = vmatprep.subr.bf16.mxu0 0
    %231 = vmatpush1.bf16.msra.mxu0 0
    %232 = vmatprep.subr.bf16.mxu0 0
    %233 = vmatpush1.bf16.msra.mxu0 0
    %234 = vmatprep.subr.bf16.mxu0 0
    %235 = vmatpush1.bf16.msra.mxu0 0
    %236 = vmatprep.subr.bf16.mxu0 0
    %237 = vmatpush1.bf16.msra.mxu0 0
    %238 = vmatprep.subr.bf16.mxu0 0
    %239 = vmatpush1.bf16.msra.mxu0 0
    %240 = vmatprep.subr.bf16.mxu0 0
    %241 = vmatpush1.bf16.msra.mxu0 0
    %242 = vmatprep.mubr.bf16.mxu0 0
    %243 = vmatmul.mubr.bf16.gmra.mrb[0].mxu0 %v208
    %v244 = vpop.f32.mrb[0].mxu0
    %v245 = vadd.f32 %v193, %v244
    %v246 = vpop.f32.mrb[0].mxu0
    %v247 = vpop.f32.mrb[0].mxu0
    %v248 = vpop.f32.mrb[0].mxu0
    %249 = vdwg.mxu0
    %v250 = vxor.u32 %v245, 2147483648
    %v251 = vmul.f32 %v250, 1.442695
    %v252 = vpow.pop %v251
    %v253 = vadd.f32 %v252, 1.0
    %v254 = vrcp.pop %v253
    %v255 = vmul.f32 1.0, %v254
    %256 = vst.msk [vmem:[#allocation2] sm:$0xff] %vm53, %v255
    // Predicated region
    $region30: #{tpu_custom_call.1} parent=1 // pred_check
      _
    $region31: #{tpu_custom_call.1} parent=1 // pred_check_branch
      %258 = sbr.rel (0) target = $region33
    $region32: #{tpu_custom_call.1} parent=1 // pred_region
      %s260 = ssub.s32 128, 128
      %261 = vsyncadd [#allocation3], %s260
      %s263 = sshll.u32 [#allocation2], 4
      %s264 = int_to_ptr.vmem [resolvable:$true] %s263
      %266 = dma.vmem_to_hbm [thread:$0]  %s264, 128, %s7, [#allocation3]
    $region33: #{tpu_custom_call.1} parent=1 // pred_fallthru
      _
    // Predicated region
    $region34: #{tpu_custom_call.1} parent=1 // pred_check
      _
    $region35: #{tpu_custom_call.1} parent=1 // pred_check_branch
      %268 = sbr.rel (0) target = $region37
    $region36: #{tpu_custom_call.1} parent=1 // pred_region
      %269 = dma.done [#allocation3], 128
    $region37: #{tpu_custom_call.1} parent=1 // pred_fallthru
      _
    %270 = vsyncpa [#allocation3], 1

</llo_original>
